<compile_context>
chip_gen: v7x
topology: tpu7x:2x2x1
jax: 0.10.0
libtpu: 0.0.40
codegen_flags: <defaults>
</compile_context>

<pallas_src>
import functools
import math

import jax
import jax.numpy as jnp
from jax import lax
from jax.experimental import pallas as pl
from jax.experimental.pallas import tpu as pltpu

F32 = jnp.float32
BF16 = jnp.bfloat16
_NEG_INF = -1e30


# --------------------------------------------------------------------------
# tiling / hardware helpers
# --------------------------------------------------------------------------
def _round_up(x, m):
    return ((x + m - 1) // m) * m


@functools.lru_cache(maxsize=None)
def _vmem_limit_bytes():
    # Generation-aware scoped-VMEM limit: ~75% of physical per-core VMEM.
    # v5e/v6e (128 MiB) -> ~96 MiB, v7x (64 MiB) -> 48 MiB.
    cap = 64 * 1024 * 1024
    try:
        cap = int(pltpu.get_tpu_info().vmem_capacity_bytes)
    except Exception:
        pass
    return int(min((cap * 3) // 4, 100 * 1024 * 1024))


def _seq_tiling(s):
    """Sequence padding + query-row tile. Always keeps row tiling active."""
    if s >= 128:
        tq = 128
    else:
        tq = _round_up(s, 16)          # sublane-friendly for bf16 too
    return _round_up(s, tq), tq


def _mlp_tiling(i):
    """Intermediate-dim padding + chunk size (512 fills the 256-wide MXU)."""
    ti = min(512, _round_up(i, 128))
    return _round_up(i, ti), ti


def _heads_per_group(num_heads, head_dim):
    """Heads per lane-dense store group (group width = multiple of 128 lanes)."""
    if head_dim >= 128 or 128 % head_dim != 0:
        return 1
    return math.gcd(num_heads, 128 // head_dim)


# --------------------------------------------------------------------------
# shared in-kernel math helpers
# --------------------------------------------------------------------------
def _layer_norm(h, w, b, eps):
    mu = jnp.mean(h, axis=-1, keepdims=True)
    var = jnp.mean((h - mu) ** 2, axis=-1, keepdims=True)
    return (h - mu) * lax.rsqrt(var + eps) * w + b


def _gelu_tanh(x):
    # PyTorch F.gelu(..., approximate='tanh')
    c = math.sqrt(2.0 / math.pi)
    return 0.5 * x * (1.0 + jnp.tanh(c * (x + 0.044715 * x * x * x)))


# --------------------------------------------------------------------------
# 1) patch embedding: patches @ Wp + bp + pos   (row-tiled over the sequence)
# --------------------------------------------------------------------------
def patch_embed_kernel(p_ref, wp_ref, bp_ref, pos_ref, o_ref):
    o_ref[0] = (jnp.dot(p_ref[0], wp_ref[...], preferred_element_type=F32)
                + bp_ref[...] + pos_ref[...])


def patch_embed(patches, wp, bp, pos, *, tq):
    B, s_pad, P = patches.shape
    D = wp.shape[1]
    n_s = s_pad // tq
    return pl.pallas_call(
        patch_embed_kernel,
        out_shape=jax.ShapeDtypeStruct((B, s_pad, D), F32),
        grid_spec=pltpu.PrefetchScalarGridSpec(
            num_scalar_prefetch=0,
            grid=(B, n_s),
            in_specs=[
                pl.BlockSpec((1, tq, P), lambda b, i: (b, i, 0)),
                pl.BlockSpec((P, D), lambda b, i: (0, 0)),
                pl.BlockSpec((1, D), lambda b, i: (0, 0)),
                pl.BlockSpec((tq, D), lambda b, i: (i, 0)),
            ],
            out_specs=pl.BlockSpec((1, tq, D), lambda b, i: (b, i, 0)),
        ),
        compiler_params=pltpu.CompilerParams(
            dimension_semantics=("parallel", "parallel"),
            vmem_limit_bytes=_vmem_limit_bytes(),
        ),
    )(patches, wp, bp, pos)


# --------------------------------------------------------------------------
# 2a) LN1 + fused QKV projection, row-tiled.  Wq/bq pre-scaled by 1/sqrt(hd).
# --------------------------------------------------------------------------
def ln_qkv_kernel(x_ref, lw_ref, lb_ref, wqkv_ref, bqkv_ref,
                  q_ref, k_ref, v_ref, *, eps, d):
    h = _layer_norm(x_ref[0], lw_ref[...], lb_ref[...], eps).astype(BF16)
    qkv = (jnp.dot(h, wqkv_ref[...], preferred_element_type=F32)
           + bqkv_ref[...]).astype(BF16)
    q_ref[0] = qkv[:, :d]
    k_ref[0] = qkv[:, d:2 * d]
    v_ref[0] = qkv[:, 2 * d:]


def ln_qkv(x, lp, *, eps, tq):
    B, s_pad, D = x.shape
    n_s = s_pad // tq
    seq = pl.BlockSpec((1, tq, D), lambda b, i: (b, i, 0))
    row = pl.BlockSpec((1, D), lambda b, i: (0, 0))
    return pl.pallas_call(
        functools.partial(ln_qkv_kernel, eps=eps, d=D),
        out_shape=tuple(jax.ShapeDtypeStruct((B, s_pad, D), BF16) for _ in range(3)),
        grid_spec=pltpu.PrefetchScalarGridSpec(
            num_scalar_prefetch=0,
            grid=(B, n_s),
            in_specs=[
                seq, row, row,
                pl.BlockSpec((D, 3 * D), lambda b, i: (0, 0)),
                pl.BlockSpec((1, 3 * D), lambda b, i: (0, 0)),
            ],
            out_specs=(seq, seq, seq),
        ),
        compiler_params=pltpu.CompilerParams(
            dimension_semantics=("parallel", "parallel"),
            vmem_limit_bytes=_vmem_limit_bytes(),
        ),
    )(x, lp["ln1_w"], lp["ln1_b"], lp["wqkv"], lp["bqkv"])


# --------------------------------------------------------------------------
# 2b) attention core (query-row tiled, K pre-transposed) + out-proj + residual
# --------------------------------------------------------------------------
def attention_kernel(q_ref, kt_ref, v_ref, x_ref, kbias_ref, wo_ref, bo_ref,
                     o_ref, attn_scratch, *, num_heads, head_dim,
                     heads_per_group, masked):
    q = q_ref[0]     # (tq, D)     bf16, already scaled by 1/sqrt(head_dim)
    kt = kt_ref[0]   # (D, S_pad)  bf16, K transposed once per layer outside
    v = v_ref[0]     # (S_pad, D)  bf16
    gw = heads_per_group * head_dim
    # Static loop over head groups; each group's intermediates die at the
    # lane-dense group store, keeping the live set small even when unrolled.
    for g in range(num_heads // heads_per_group):
        outs = []
        for j in range(heads_per_group):
            h = g * heads_per_group + j
            sl = slice(h * head_dim, (h + 1) * head_dim)
            # plain (tq,hd)x(hd,S) MXU matmul — no per-head XLU transpose.
            scores = jnp.dot(q[:, sl], kt[sl, :],
                             preferred_element_type=F32)          # (tq, S_pad) f32
            if masked:
                scores = scores + kbias_ref[...]                  # mask padded keys
            scores = scores - jnp.max(scores, axis=-1, keepdims=True)
            p = jnp.exp(scores)
            p = p * pl.reciprocal(jnp.sum(p, axis=-1, keepdims=True), approx=True)
            outs.append(jnp.dot(p.astype(BF16), v[:, sl],
                                preferred_element_type=F32))      # (tq, hd) f32
        blk = outs[0] if heads_per_group == 1 else jnp.concatenate(outs, axis=-1)
        # lane-dense (>=128-wide when head_dim divides 128) bf16 store
        attn_scratch[:, g * gw:(g + 1) * gw] = blk.astype(BF16)
    # TODO(synk): for very long sequences add online-softmax KV tiling so the
    # full (S, D) K/V blocks need not be resident in VMEM.
    o_ref[0] = (jnp.dot(attn_scratch[...], wo_ref[...],
                        preferred_element_type=F32)
                + bo_ref[...] + x_ref[0])


def attention(q, kt, v, x, key_bias, wo, bo, *, num_heads, tq, masked):
    B, s_pad, D = x.shape
    head_dim = D // num_heads
    hpg = _heads_per_group(num_heads, head_dim)
    n_q = s_pad // tq
    return pl.pallas_call(
        functools.partial(attention_kernel, num_heads=num_heads,
                          head_dim=head_dim, heads_per_group=hpg, masked=masked),
        out_shape=jax.ShapeDtypeStruct((B, s_pad, D), F32),
        grid_spec=pltpu.PrefetchScalarGridSpec(
            num_scalar_prefetch=0,
            grid=(B, n_q),
            in_specs=[
                pl.BlockSpec((1, tq, D), lambda b, i: (b, i, 0)),      # q tile
                pl.BlockSpec((1, D, s_pad), lambda b, i: (b, 0, 0)),   # K^T (full)
                pl.BlockSpec((1, s_pad, D), lambda b, i: (b, 0, 0)),   # V   (full)
                pl.BlockSpec((1, tq, D), lambda b, i: (b, i, 0)),      # residual x
                pl.BlockSpec((1, s_pad), lambda b, i: (0, 0)),         # key bias
                pl.BlockSpec((D, D), lambda b, i: (0, 0)),             # Wo
                pl.BlockSpec((1, D), lambda b, i: (0, 0)),             # bo
            ],
            out_specs=pl.BlockSpec((1, tq, D), lambda b, i: (b, i, 0)),
            scratch_shapes=[pltpu.VMEM((tq, D), BF16)],
        ),
        compiler_params=pltpu.CompilerParams(
            dimension_semantics=("parallel", "parallel"),
            vmem_limit_bytes=_vmem_limit_bytes(),
        ),
    )(q, kt, v, x, key_bias, wo, bo)


# --------------------------------------------------------------------------
# 2c) LN2 + MLP, tiled over sequence rows AND intermediate-dim chunks
#     (reduction axis last; output block resident across it)
# --------------------------------------------------------------------------
def mlp_kernel(y_ref, lw_ref, lb_ref, w1_ref, b1_ref, w2_ref, b2_ref,
               o_ref, h2_scratch, *, eps):
    kk = pl.program_id(2)

    @pl.when(kk == 0)
    def _():
        y = y_ref[0]
        h2_scratch[...] = _layer_norm(y, lw_ref[...], lb_ref[...], eps).astype(BF16)
        o_ref[0] = y + b2_ref[...]          # residual + final bias (init accumulator)

    m = (jnp.dot(h2_scratch[...], w1_ref[...], preferred_element_type=F32)
         + b1_ref[...])                      # (ts, ti) f32
    m = _gelu_tanh(m).astype(BF16)
    o_ref[0] = o_ref[0] + jnp.dot(m, w2_ref[...], preferred_element_type=F32)


def mlp(y, lw, lb, w1, b1, w2, b2, *, eps, ts):
    B, s_pad, D = y.shape
    i_pad = w1.shape[1]                      # already zero-padded to multiple of ti
    ti = min(512, i_pad)
    nk = i_pad // ti
    n_s = s_pad // ts
    return pl.pallas_call(
        functools.partial(mlp_kernel, eps=eps),
        out_shape=jax.ShapeDtypeStruct((B, s_pad, D), F32),
        grid_spec=pltpu.PrefetchScalarGridSpec(
            num_scalar_prefetch=0,
            grid=(B, n_s, nk),
            in_specs=[
                pl.BlockSpec((1, ts, D), lambda b, i, k: (b, i, 0)),   # y (residual)
                pl.BlockSpec((1, D), lambda b, i, k: (0, 0)),          # ln2_w
                pl.BlockSpec((1, D), lambda b, i, k: (0, 0)),          # ln2_b
                pl.BlockSpec((D, ti), lambda b, i, k: (0, k)),         # W1 chunk
                pl.BlockSpec((1, ti), lambda b, i, k: (0, k)),         # b1 chunk
                pl.BlockSpec((ti, D), lambda b, i, k: (k, 0)),         # W2 chunk
                pl.BlockSpec((1, D), lambda b, i, k: (0, 0)),          # b2
            ],
            out_specs=pl.BlockSpec((1, ts, D), lambda b, i, k: (b, i, 0)),
            scratch_shapes=[pltpu.VMEM((ts, D), BF16)],
        ),
        compiler_params=pltpu.CompilerParams(
            dimension_semantics=("parallel", "parallel", "arbitrary"),
            vmem_limit_bytes=_vmem_limit_bytes(),
        ),
    )(y, lw, lb, w1, b1, w2, b2)


# --------------------------------------------------------------------------
# 3) post layernorm (row-tiled)
# --------------------------------------------------------------------------
def post_ln_kernel(x_ref, w_ref, b_ref, o_ref, *, eps):
    o_ref[0] = _layer_norm(x_ref[0], w_ref[...], b_ref[...], eps)


def post_layernorm(x, w, b, *, eps, tq):
    B, s_pad, D = x.shape
    n_s = s_pad // tq
    return pl.pallas_call(
        functools.partial(post_ln_kernel, eps=eps),
        out_shape=jax.ShapeDtypeStruct((B, s_pad, D), F32),
        grid_spec=pltpu.PrefetchScalarGridSpec(
            num_scalar_prefetch=0,
            grid=(B, n_s),
            in_specs=[
                pl.BlockSpec((1, tq, D), lambda b, i: (b, i, 0)),
                pl.BlockSpec((1, D), lambda b, i: (0, 0)),
                pl.BlockSpec((1, D), lambda b, i: (0, 0)),
            ],
            out_specs=pl.BlockSpec((1, tq, D), lambda b, i: (b, i, 0)),
        ),
        compiler_params=pltpu.CompilerParams(
            dimension_semantics=("parallel", "parallel"),
            vmem_limit_bytes=_vmem_limit_bytes(),
        ),
    )(x, w, b)


# --------------------------------------------------------------------------
# full model wrapper
# --------------------------------------------------------------------------
def encoder_layer(x, lp, key_bias, *, num_heads, eps, tq, masked):
    q, k, v = ln_qkv(x, lp, eps=eps, tq=tq)
    # K transposed ONCE per layer (cheap XLA relayout in HBM) so the per-head
    # QK^T inside the attention kernel needs no repeated XLU transpose.
    kt = jnp.swapaxes(k, 1, 2)                      # (B, D, S_pad) bf16
    y = attention(q, kt, v, x, key_bias, lp["wo"], lp["bo"],
                  num_heads=num_heads, tq=tq, masked=masked)
    return mlp(y, lp["ln2_w"], lp["ln2_b"], lp["w1"], lp["b1"],
               lp["w2"], lp["b2"], eps=eps, ts=tq)


def siglip_vision_transformer(img, prep, *, patch_size, num_heads, eps):
    B, C, H, W = img.shape
    p = patch_size
    gh, gw = H // p, W // p
    S = gh * gw
    # im2col for the stride==kernel 'valid' patch conv (layout plumbing only)
    patches = (img.reshape(B, C, gh, p, gw, p)
                  .transpose(0, 2, 4, 1, 3, 5)
                  .reshape(B, S, C * p * p))
    s_pad, tq = _seq_tiling(S)
    masked = s_pad != S
    if masked:
        patches = jnp.pad(patches, ((0, 0), (0, s_pad - S), (0, 0)))
    patches = patches.astype(BF16)
    # additive key bias: 0 for real keys, -1e30 for padded keys
    key_bias = jnp.where(jnp.arange(s_pad)[None, :] < S, 0.0, _NEG_INF).astype(F32)

    x = patch_embed(patches, prep["wp"], prep["bp"], prep["pos"], tq=tq)
    for lp in prep["layers"]:
        x = encoder_layer(x, lp, key_bias, num_heads=num_heads, eps=eps,
                          tq=tq, masked=masked)
    x = post_layernorm(x, prep["post_ln_w"], prep["post_ln_b"], eps=eps, tq=tq)
    return x[:, :S, :]


# --------------------------------------------------------------------------
# parameters
# --------------------------------------------------------------------------
def init_params(key, *, num_channels, patch_size, image_size, hidden,
                intermediate, num_layers):
    patch_dim = num_channels * patch_size * patch_size
    num_patches = (image_size // patch_size) ** 2
    keys = jax.random.split(key, 3 + num_layers)

    def nrm(k, shape, scale=0.05):
        return (scale * jax.random.normal(k, shape)).astype(F32)

    def init_layer(k):
        ks = jax.random.split(k, 12)
        return {
            "ln1_w": jnp.ones((1, hidden), F32), "ln1_b": jnp.zeros((1, hidden), F32),
            "wq": nrm(ks[0], (hidden, hidden)), "bq": nrm(ks[1], (1, hidden)),
            "wk": nrm(ks[2], (hidden, hidden)), "bk": nrm(ks[3], (1, hidden)),
            "wv": nrm(ks[4], (hidden, hidden)), "bv": nrm(ks[5], (1, hidden)),
            "wo": nrm(ks[6], (hidden, hidden)), "bo": nrm(ks[7], (1, hidden)),
            "ln2_w": jnp.ones((1, hidden), F32), "ln2_b": jnp.zeros((1, hidden), F32),
            "w1": nrm(ks[8], (hidden, intermediate)), "b1": nrm(ks[9], (1, intermediate)),
            "w2": nrm(ks[10], (intermediate, hidden)), "b2": nrm(ks[11], (1, hidden)),
        }

    return {
        "wp": nrm(keys[0], (patch_dim, hidden)),
        "bp": nrm(keys[1], (1, hidden)),
        "pos": nrm(keys[2], (num_patches, hidden), scale=0.02),
        "post_ln_w": jnp.ones((1, hidden), F32),
        "post_ln_b": jnp.zeros((1, hidden), F32),
        "layers": [init_layer(keys[3 + i]) for i in range(num_layers)],
    }


def prepare_params(params, *, num_heads):
    """One-time prep: bf16 MXU weights, fused QKV with 1/sqrt(hd) folded into
    Wq/bq, zero-padded pos (sequence) and W1/b1/W2 (intermediate dim)."""
    hidden = params["layers"][0]["wq"].shape[0]
    scale = 1.0 / math.sqrt(hidden // num_heads)

    num_patches = params["pos"].shape[0]
    s_pad, _ = _seq_tiling(num_patches)
    pos = params["pos"]
    if s_pad != num_patches:
        pos = jnp.pad(pos, ((0, s_pad - num_patches), (0, 0)))

    prep = {
        "wp": params["wp"].astype(BF16),
        "bp": params["bp"],
        "pos": pos,
        "post_ln_w": params["post_ln_w"],
        "post_ln_b": params["post_ln_b"],
        "layers": [],
    }
    for lp in params["layers"]:
        inter = lp["w1"].shape[1]
        i_pad, _ = _mlp_tiling(inter)
        w1, b1, w2 = lp["w1"], lp["b1"], lp["w2"]
        if i_pad != inter:
            w1 = jnp.pad(w1, ((0, 0), (0, i_pad - inter)))
            b1 = jnp.pad(b1, ((0, 0), (0, i_pad - inter)))
            w2 = jnp.pad(w2, ((0, i_pad - inter), (0, 0)))
        wqkv = jnp.concatenate([lp["wq"] * scale, lp["wk"], lp["wv"]],
                               axis=1).astype(BF16)
        bqkv = jnp.concatenate([lp["bq"] * scale, lp["bk"], lp["bv"]], axis=1)
        prep["layers"].append({
            "ln1_w": lp["ln1_w"], "ln1_b": lp["ln1_b"],
            "wqkv": wqkv, "bqkv": bqkv,
            "wo": lp["wo"].astype(BF16), "bo": lp["bo"],
            "ln2_w": lp["ln2_w"], "ln2_b": lp["ln2_b"],
            "w1": w1.astype(BF16), "b1": b1,
            "w2": w2.astype(BF16), "b2": lp["b2"],
        })
    return prep


# --------------------------------------------------------------------------
# plain-JAX reference (mirrors the kernel's mixed precision: bf16 MXU inputs,
# f32 accumulation and f32 elementwise math; operates on the unpadded sequence)
# --------------------------------------------------------------------------
def _qz(x):
    return x.astype(BF16).astype(F32)


def reference(img, prep, *, patch_size, num_heads, eps):
    B, C, H, W = img.shape
    p = patch_size
    g = H // p
    S = g * g
    patches = (img.reshape(B, C, g, p, g, p)
                  .transpose(0, 2, 4, 1, 3, 5)
                  .reshape(B, S, C * p * p))

    def ln(h, w, b):
        mu = jnp.mean(h, axis=-1, keepdims=True)
        var = jnp.mean((h - mu) ** 2, axis=-1, keepdims=True)
        return (h - mu) / jnp.sqrt(var + eps) * w + b

    x = _qz(patches) @ _qz(prep["wp"]) + prep["bp"] + prep["pos"][:S]

    for lp in prep["layers"]:
        B_, S_, D = x.shape
        hd = D // num_heads
        h1 = _qz(ln(x, lp["ln1_w"], lp["ln1_b"]))
        qkv = h1 @ _qz(lp["wqkv"]) + lp["bqkv"]      # wq/bq already carry 1/sqrt(hd)
        q = _qz(qkv[..., :D])
        k = _qz(qkv[..., D:2 * D])
        v = _qz(qkv[..., 2 * D:])
        qh = q.reshape(B_, S_, num_heads, hd).transpose(0, 2, 1, 3)
        kh = k.reshape(B_, S_, num_heads, hd).transpose(0, 2, 1, 3)
        vh = v.reshape(B_, S_, num_heads, hd).transpose(0, 2, 1, 3)
        s = jnp.einsum("bhqd,bhkd->bhqk", qh, kh)
        s = s - s.max(-1, keepdims=True)
        pr = jnp.exp(s)
        pr = pr / pr.sum(-1, keepdims=True)
        at = jnp.einsum("bhqk,bhkd->bhqd", _qz(pr), vh)
        at = at.transpose(0, 2, 1, 3).reshape(B_, S_, D)
        y = _qz(at) @ _qz(lp["wo"]) + lp["bo"] + x
        h2 = _qz(ln(y, lp["ln2_w"], lp["ln2_b"]))
        m = h2 @ _qz(lp["w1"]) + lp["b1"]
        c = math.sqrt(2.0 / math.pi)
        m = 0.5 * m * (1.0 + jnp.tanh(c * (m + 0.044715 * m ** 3)))
        x = y + lp["b2"] + _qz(m) @ _qz(lp["w2"])

    return ln(x, prep["post_ln_w"], prep["post_ln_b"])


# --------------------------------------------------------------------------
if __name__ == "__main__":
    # Small config consistent with SiglipVisionConfig semantics.
    # S = 36 patches -> padded to 48 inside the kernels (exercises key masking).
    B, C, IMG, PATCH = 2, 3, 48, 8
    HIDDEN, INTER, HEADS, LAYERS = 64, 256, 4, 2
    EPS = 1e-6
    S = (IMG // PATCH) ** 2

    key = jax.random.PRNGKey(0)
    kp, kx = jax.random.split(key)

    params = init_params(kp, num_channels=C, patch_size=PATCH, image_size=IMG,
                         hidden=HIDDEN, intermediate=INTER, num_layers=LAYERS)
    prep = prepare_params(params, num_heads=HEADS)

    img = jax.random.normal(kx, (B, C, IMG, IMG), F32)

    out = siglip_vision_transformer(img, prep, patch_size=PATCH,
                                    num_heads=HEADS, eps=EPS)
    out = jax.block_until_ready(out)

    ref = reference(img, prep, patch_size=PATCH, num_heads=HEADS, eps=EPS)
    assert out.shape == (B, S, HIDDEN), f"bad shape {out.shape}"
    assert jnp.allclose(out, ref, rtol=2e-2, atol=2e-2), (
        "mismatch vs reference, max abs diff = "
        f"{float(jnp.max(jnp.abs(out - ref)))}")

    print("KERNEL_OK")
</pallas_src>

<mosaic_0001>
module attributes {stable_mosaic.version = 11 : i64} {
  func.func @patch_embed_kernel(%arg0: i32, %arg1: i32, %arg2: memref<1x48x192xbf16, #tpu.memory_space<vmem>>, %arg3: memref<192x64xbf16, #tpu.memory_space<vmem>>, %arg4: memref<1x64xf32, #tpu.memory_space<vmem>>, %arg5: memref<48x64xf32, #tpu.memory_space<vmem>>, %arg6: memref<1x48x64xf32, #tpu.memory_space<vmem>>) attributes {dimension_semantics = [#tpu.dimension_semantics<parallel>, #tpu.dimension_semantics<parallel>], iteration_bounds = array<i64: 2, 1>, scalar_prefetch = 0 : i64, scratch_operands = 0 : i64, tpu.core_type = #tpu.core_type<tc>, window_params = [{transform_indices = @transform_0, window_bounds = array<i64: 1, 48, 192>}, {pipeline_mode = #tpu.pipeline_mode<synchronous>, transform_indices = @transform_1, window_bounds = array<i64: 192, 64>}, {pipeline_mode = #tpu.pipeline_mode<synchronous>, transform_indices = @transform_2, window_bounds = array<i64: 1, 64>}, {transform_indices = @transform_3, window_bounds = array<i64: 48, 64>}, {transform_indices = @transform_4, window_bounds = array<i64: 1, 48, 64>}]} {
    %c0 = arith.constant 0 : index
    %c0_0 = arith.constant 0 : index
    %c0_1 = arith.constant 0 : index
    %0 = vector.load %arg2[%c0, %c0_0, %c0_1] : memref<1x48x192xbf16, #tpu.memory_space<vmem>>, vector<1x48x192xbf16>
    %1 = vector.shape_cast %0 : vector<1x48x192xbf16> to vector<48x192xbf16>
    %c0_2 = arith.constant 0 : index
    %c0_3 = arith.constant 0 : index
    %2 = vector.load %arg3[%c0_2, %c0_3] : memref<192x64xbf16, #tpu.memory_space<vmem>>, vector<192x64xbf16>
    %cst = arith.constant dense<0.000000e+00> : vector<48x64xf32>
    %3 = tpu.matmul %1, %2, %cst {dimension_numbers = #tpu.dot_dimension_numbers<[1], [0], [0], [1], [0, 0, 1, 1], [], []>} : vector<48x192xbf16>, vector<192x64xbf16>, vector<48x64xf32> -> vector<48x64xf32>
    %c0_4 = arith.constant 0 : index
    %c0_5 = arith.constant 0 : index
    %4 = vector.load %arg4[%c0_4, %c0_5] : memref<1x64xf32, #tpu.memory_space<vmem>>, vector<1x64xf32>
    %5 = vector.broadcast %4 : vector<1x64xf32> to vector<48x64xf32>
    %6 = arith.addf %3, %5 : vector<48x64xf32>
    %c0_6 = arith.constant 0 : index
    %c0_7 = arith.constant 0 : index
    %7 = vector.load %arg5[%c0_6, %c0_7] : memref<48x64xf32, #tpu.memory_space<vmem>>, vector<48x64xf32>
    %8 = arith.addf %6, %7 : vector<48x64xf32>
    %c0_8 = arith.constant 0 : index
    %c0_9 = arith.constant 0 : index
    %c0_10 = arith.constant 0 : index
    %9 = vector.load %arg6[%c0_8, %c0_9, %c0_10] : memref<1x48x64xf32, #tpu.memory_space<vmem>>, vector<1x48x64xf32>
    %10 = vector.shape_cast %9 : vector<1x48x64xf32> to vector<48x64xf32>
    %11 = vector.shape_cast %8 : vector<48x64xf32> to vector<1x48x64xf32>
    tpu.vector_store %arg6[%c0_8, %c0_9, %c0_10], %11 {strides = array<i32>} : memref<1x48x64xf32, #tpu.memory_space<vmem>>, vector<1x48x64xf32>,
    return
  }
  func.func @transform_0(%arg0: i32, %arg1: i32) -> (i32, i32, i32) {
    %c0_i32 = arith.constant 0 : i32
    %c0_i32_0 = arith.constant 0 : i32
    return %arg0, %arg1, %c0_i32 : i32, i32, i32
  }
  func.func @transform_1(%arg0: i32, %arg1: i32) -> (i32, i32) {
    %c0_i32 = arith.constant 0 : i32
    %c0_i32_0 = arith.constant 0 : i32
    %c0_i32_1 = arith.constant 0 : i32
    return %c0_i32, %c0_i32_0 : i32, i32
  }
  func.func @transform_2(%arg0: i32, %arg1: i32) -> (i32, i32) {
    %c0_i32 = arith.constant 0 : i32
    %c0_i32_0 = arith.constant 0 : i32
    %c0_i32_1 = arith.constant 0 : i32
    return %c0_i32, %c0_i32_0 : i32, i32
  }
  func.func @transform_3(%arg0: i32, %arg1: i32) -> (i32, i32) {
    %c0_i32 = arith.constant 0 : i32
    %c0_i32_0 = arith.constant 0 : i32
    return %arg1, %c0_i32 : i32, i32
  }
  func.func @transform_4(%arg0: i32, %arg1: i32) -> (i32, i32, i32) {
    %c0_i32 = arith.constant 0 : i32
    %c0_i32_0 = arith.constant 0 : i32
    return %arg0, %arg1, %c0_i32 : i32, i32, i32
  }
}

</mosaic_0001>

<llo_original>
// kernel: tpu_custom_call.1
$region0: #{tpu_custom_call.1}
  #allocation0 [shape = 'u32[]', space=smem, size = 0x4, offset = 0x4, fixed_abs, tag = 'smem constant byte address 0x4 - core index']
  #allocation1 [shape = 'u32[144,128]{1,0:T(1,128)}', space=vmem, size = 0x12000, scoped, tag = 'internal scratch']
  %s0 = inlined_call_operand.vmem [shape: bf16[2,48,192], index: 0, kind: input, shape index: {}]
  %s1 = inlined_call_operand.vmem [shape: bf16[192,64], index: 1, kind: input, shape index: {}]
  %s2 = inlined_call_operand.vmem [shape: f32[1,64], index: 2, kind: input, shape index: {}]
  %s3 = inlined_call_operand.vmem [shape: f32[48,64], index: 3, kind: input, shape index: {}]
  %s4 = inlined_call_operand.hbm [shape: f32[2,48,64], index: 4, kind: output, shape index: {}]
  %s5 = sld [smem:[#allocation0]]
  $region49: #{tpu_custom_call.1} parent=0
    _
  %s7 = ssub.s32 1, %s5
  %s8 = scalar_select 0, %s7, %s5
  $region1: #{tpu_custom_call.1} parent=0
    #allocation2 [shape = 'u8[49152]{0}', space=vmem, size = 0xc000, scoped, tag = 'output window, operand 0']
    #allocation3 [shape = 's32[2]{0}', space=sflag, size = 0x8, scoped, tag = 'scoped memory for tpu_custom_call.1']
    %9 = vsyncpa [#allocation3], 0
    %s10 = scalar_lea.sflag [#allocation3], 1
    %11 = vsyncpa %s10, 0
    loop: start=0, step=1, limit=4
    $region2: #{tpu_custom_call.1} parent=1 // loop_pre_header
      _
    $region3: #{tpu_custom_call.1} parent=1 // loop_header
      %s13 = sphi 0, %s17
      %p14 = scmp.ge.s32.totalorder %s13, 4
      %s20 = sphi 0, %s32
      %s21 = sphi 0, %s28
      %s22 = sphi 0, %s20
      %s23 = sphi 0, %s21
      %s24 = sphi 0, %s22
      %s25 = sphi 0, %s23
      %s37 = sphi 0, %s39
      %s40 = sphi 0, %s37
      %s41 = sphi 0, %s40
      %s57 = sphi 0, %s41
      %s61 = sphi 0, %s61
      %s63 = sphi 0, %s61
      %s64 = sphi 0, %s63
      %s78 = sphi 0, %s64
      %s82 = sphi 0, %s82
      %s84 = sphi 0, %s82
      %s85 = sphi 0, %s84
      %s99 = sphi 0, %s85
      %s105 = sphi 0, %s107
      %s108 = sphi 0, %s105
      %s109 = sphi 0, %s108
      %s125 = sphi 0, %s109
      %s133 = sphi 0, %s135
      %s136 = sphi 0, %s133
      %s137 = sphi 0, %s136
      %s153 = sphi 0, %s137
    $region4: #{tpu_custom_call.1} parent=1 // loop_header_branch
      %16 = sbr.rel (%p14) target = $region8
    $region5: #{tpu_custom_call.1} parent=1 // loop_body
      %s18 = ssub.s32 %s13, 1
      %s19 = ssub.s32 %s13, 2
      %s26 = sadd.s32 1, %s21
      %p27 = scmp.ge.s32.totalorder %s26, 1
      %s28 = scalar_select %p27, 0, %s26
      %s29 = sadd.s32 1, %s20
      %s30 = scalar_select %p27, %s29, %s20
      %p31 = scmp.ge.s32.totalorder %s30, 2
      %s32 = scalar_select %p31, 0, %s30
      %s33 = ssub.s32 %s20, %s32
      %s34 = ssub.s32 %s21, %s28
      %s35 = sor.u32 %s33, %s34
      %p36 = scmp.eq.s32.totalorder %s35, 0
      %s38 = sadd.s32 %s37, 1
      %s39 = scalar_select %p36, %s37, %s38
      %p42 = pneg %p36
      %p43 = scmp.eq.s32.totalorder %s13, 1
      %p44 = por %p42, %p43
      %p45 = scmp.ne.s32.totalorder %s37, %s40
      %p46 = scmp.eq.s32.totalorder %s13, 0
      %p47 = por %p45, %p46
      %p48 = scmp.ne.s32.totalorder %s37, %s40
      %p49 = scmp.eq.s32.totalorder %s18, 1
      %p50 = por %p48, %p49
      %p51 = scmp.ne.s32.totalorder %s40, %s41
      %p52 = scmp.eq.s32.totalorder %s18, 0
      %p53 = por %p51, %p52
      %p54 = scmp.ne.s32.totalorder %s40, %s41
      %p55 = scmp.eq.s32.totalorder %s19, 1
      %p56 = por %p54, %p55
      %p58 = scmp.ne.s32.totalorder %s41, %s57
      %p59 = scmp.eq.s32.totalorder %s19, 0
      %p60 = por %p58, %p59
      %s62 = sadd.s32 %s61, 1
      %p65 = scmp.eq.s32.totalorder %s13, 1
      %p66 = scmp.ne.s32.totalorder %s61, %s63
      %p67 = scmp.eq.s32.totalorder %s13, 0
      %p68 = por %p66, %p67
      %p69 = scmp.ne.s32.totalorder %s61, %s63
      %p70 = scmp.eq.s32.totalorder %s18, 1
      %p71 = por %p69, %p70
      %p72 = scmp.ne.s32.totalorder %s63, %s64
      %p73 = scmp.eq.s32.totalorder %s18, 0
      %p74 = por %p72, %p73
      %p75 = scmp.ne.s32.totalorder %s63, %s64
      %p76 = scmp.eq.s32.totalorder %s19, 1
      %p77 = por %p75, %p76
      %p79 = scmp.ne.s32.totalorder %s64, %s78
      %p80 = scmp.eq.s32.totalorder %s19, 0
      %p81 = por %p79, %p80
      %s83 = sadd.s32 %s82, 1
      %p86 = scmp.eq.s32.totalorder %s13, 1
      %p87 = scmp.ne.s32.totalorder %s82, %s84
      %p88 = scmp.eq.s32.totalorder %s13, 0
      %p89 = por %p87, %p88
      %p90 = scmp.ne.s32.totalorder %s82, %s84
      %p91 = scmp.eq.s32.totalorder %s18, 1
      %p92 = por %p90, %p91
      %p93 = scmp.ne.s32.totalorder %s84, %s85
      %p94 = scmp.eq.s32.totalorder %s18, 0
      %p95 = por %p93, %p94
      %p96 = scmp.ne.s32.totalorder %s84, %s85
      %p97 = scmp.eq.s32.totalorder %s19, 1
      %p98 = por %p96, %p97
      %p100 = scmp.ne.s32.totalorder %s85, %s99
      %p101 = scmp.eq.s32.totalorder %s19, 0
      %p102 = por %p100, %p101
      %s103 = ssub.s32 %s21, %s28
      %p104 = scmp.eq.s32.totalorder %s103, 0
      %s106 = sadd.s32 %s105, 1
      %s107 = scalar_select %p104, %s105, %s106
      %p110 = pneg %p104
      %p111 = scmp.eq.s32.totalorder %s13, 1
      %p112 = por %p110, %p111
      %p113 = scmp.ne.s32.totalorder %s105, %s108
      %p114 = scmp.eq.s32.totalorder %s13, 0
      %p115 = por %p113, %p114
      %p116 = scmp.ne.s32.totalorder %s105, %s108
      %p117 = scmp.eq.s32.totalorder %s18, 1
      %p118 = por %p116, %p117
      %p119 = scmp.ne.s32.totalorder %s108, %s109
      %p120 = scmp.eq.s32.totalorder %s18, 0
      %p121 = por %p119, %p120
      %p122 = scmp.ne.s32.totalorder %s108, %s109
      %p123 = scmp.eq.s32.totalorder %s19, 1
      %p124 = por %p122, %p123
      %p126 = scmp.ne.s32.totalorder %s109, %s125
      %p127 = scmp.eq.s32.totalorder %s19, 0
      %p128 = por %p126, %p127
      %s129 = ssub.s32 %s20, %s32
      %s130 = ssub.s32 %s21, %s28
      %s131 = sor.u32 %s129, %s130
      %p132 = scmp.eq.s32.totalorder %s131, 0
      %s134 = sadd.s32 %s133, 1
      %s135 = scalar_select %p132, %s133, %s134
      %p138 = pneg %p132
      %p139 = scmp.eq.s32.totalorder %s13, 1
      %p140 = por %p138, %p139
      %p141 = scmp.ne.s32.totalorder %s133, %s136
      %p142 = scmp.eq.s32.totalorder %s13, 0
      %p143 = por %p141, %p142
      %p144 = scmp.ne.s32.totalorder %s133, %s136
      %p145 = scmp.eq.s32.totalorder %s18, 1
      %p146 = por %p144, %p145
      %p147 = scmp.ne.s32.totalorder %s136, %s137
      %p148 = scmp.eq.s32.totalorder %s18, 0
      %p149 = por %p147, %p148
      %p150 = scmp.ne.s32.totalorder %s136, %s137
      %p151 = scmp.eq.s32.totalorder %s19, 1
      %p152 = por %p150, %p151
      %p154 = scmp.ne.s32.totalorder %s137, %s153
      %p155 = scmp.eq.s32.totalorder %s19, 0
      %p156 = por %p154, %p155
      %p157 = scmp.le.s32.totalorder 1, %s13
      %p158 = scmp.lt.s32.totalorder %s13, 3
      %p159 = pnand %p157, %p158
      %p160 = pneg %p159
      // Predicated region
      $region9: #{tpu_custom_call.1} parent=5 // pred_check
        _
      $region10: #{tpu_custom_call.1} parent=5 // pred_check_branch
        %162 = sbr.rel (%p159) target = $region12
      $region11: #{tpu_custom_call.1} parent=5 // pred_region
        %s163 = ssub.s32 %s13, 1
        // Predicated region
        $region13: #{tpu_custom_call.1} parent=11 // pred_check
          %p164 = pneg %p74
        $region14: #{tpu_custom_call.1} parent=11 // pred_check_branch
          %166 = sbr.rel (%p164) target = $region16
        $region15: #{tpu_custom_call.1} parent=11 // pred_region
          _
        $region16: #{tpu_custom_call.1} parent=11 // pred_fallthru
          _
        // Predicated region
        $region17: #{tpu_custom_call.1} parent=11 // pred_check
          %p167 = pneg %p95
        $region18: #{tpu_custom_call.1} parent=11 // pred_check_branch
          %169 = sbr.rel (%p167) target = $region20
        $region19: #{tpu_custom_call.1} parent=11 // pred_region
          _
        $region20: #{tpu_custom_call.1} parent=11 // pred_fallthru
          _
        // Predicated region
        $region21: #{tpu_custom_call.1} parent=11 // pred_check
          %p170 = pneg %p121
        $region22: #{tpu_custom_call.1} parent=11 // pred_check_branch
          %172 = sbr.rel (%p170) target = $region24
        $region23: #{tpu_custom_call.1} parent=11 // pred_region
          %s173 = smul.u32 6, %s23
          %p174 = scmp.lt.s32.totalorder %s173, 5
          %s175 = scalar_select %p174, %s173, 5
          %s176 = smul.addr %s175, 8
          %s177 = scalar_lea.vmem %s3, %s176
          %s178 = smul.u32 6, %s23
        $region24: #{tpu_custom_call.1} parent=11 // pred_fallthru
          _
      $region12: #{tpu_custom_call.1} parent=5 // pred_fallthru
        _
      %p179 = scmp.lt.s32.totalorder %s13, 2
      // Predicated region
      $region25: #{tpu_custom_call.1} parent=5 // pred_check
        %p180 = pneg %p179
      $region26: #{tpu_custom_call.1} parent=5 // pred_check_branch
        %182 = sbr.rel (%p180) target = $region28
      $region27: #{tpu_custom_call.1} parent=5 // pred_region
        // Predicated region
        $region29: #{tpu_custom_call.1} parent=27 // pred_check
          %p183 = pneg %p47
        $region30: #{tpu_custom_call.1} parent=27 // pred_check_branch
          %185 = sbr.rel (%p183) target = $region32
        $region31: #{tpu_custom_call.1} parent=27 // pred_region
          %s186 = smul.u32 6, %s21
          %p187 = scmp.lt.s32.totalorder %s20, 1
          %s188 = scalar_select %p187, %s20, 1
          %p189 = scmp.lt.s32.totalorder %s186, 5
          %s190 = scalar_select %p189, %s186, 5
          %s191 = smul.addr %s190, 2
          %s192 = smul.addr %s188, 12
          %s193 = sadd.s32 %s191, %s192
          %s194 = smul.addr %s193, 4
          %s195 = scalar_lea.vmem %s0, %s194
          %s196 = smul.u32 6, %s21
        $region32: #{tpu_custom_call.1} parent=27 // pred_fallthru
          _
      $region28: #{tpu_custom_call.1} parent=5 // pred_fallthru
        _
      %p197 = scmp.le.s32.totalorder 1, %s13
      %p198 = scmp.lt.s32.totalorder %s13, 3
      %p199 = pnand %p197, %p198
      %p200 = pneg %p199
      // Predicated region
      $region33: #{tpu_custom_call.1} parent=5 // pred_check
        _
      $region34: #{tpu_custom_call.1} parent=5 // pred_check_branch
        %202 = sbr.rel (%p199) target = $region36
      $region35: #{tpu_custom_call.1} parent=5 // pred_region
        %s203 = ssub.s32 %s13, 1
        %s204 = smul.u32 6, %s23
        %p205 = scmp.lt.s32.totalorder %s22, 1
        %s206 = scalar_select %p205, %s22, 1
        %p207 = scmp.lt.s32.totalorder %s204, 5
        %s208 = scalar_select %p207, %s204, 5
        %s209 = smul.addr %s208, 2
        %s210 = smul.addr %s206, 12
        %s211 = sadd.s32 %s209, %s210
        %s212 = smul.addr %s211, 4
        %s213 = scalar_lea.vmem %s0, %s212
        %p214 = pneg %p53
        %p215 = pneg %p50
        %p216 = pneg %p74
        %p217 = pneg %p71
        %p218 = pneg %p95
        %p219 = pneg %p92
        %s220 = smul.u32 6, %s23
        %p221 = scmp.lt.s32.totalorder %s220, 5
        %s222 = scalar_select %p221, %s220, 5
        %s223 = smul.addr %s222, 8
        %s224 = scalar_lea.vmem %s3, %s223
        %p225 = pneg %p121
        %p226 = pneg %p118
        %p227 = pneg %p149
        %p228 = pneg %p146
        %s229 = sand.u32 %s136, 1
        %s230 = scalar_lea.sflag [#allocation3], %s229
        %s231 = sand.u32 %s136, 1
        %s232 = smul.addr %s231, 48
        %s233 = scalar_lea.vmem [#allocation2], %s232
        %s234 = smul.u32 6, %s23
        %p235 = scmp.lt.s32.totalorder %s22, 1
        %s236 = scalar_select %p235, %s22, 1
        %p237 = scmp.lt.s32.totalorder %s234, 5
        %s238 = scalar_select %p237, %s234, 5
        %s239 = smul.addr %s238, 2
        %s240 = smul.addr %s236, 12
        %s241 = sadd.s32 %s239, %s240
        %s242 = smul.addr %s241, 4
        %s243 = scalar_lea.vmem %s0, %s242
        %s244 = smul.u32 6, %s23
        %s245 = smul.u32 6, %s23
        %p246 = scmp.lt.s32.totalorder %s245, 5
        %s247 = scalar_select %p246, %s245, 5
        %s248 = smul.addr %s247, 8
        %s249 = scalar_lea.vmem %s3, %s248
        %s250 = smul.u32 6, %s23
        %s251 = smul.u32 6, %s23
        %v253 = vld [vmem:[%s243] sm:$0xff]
        %v254 = vld [vmem:[%s243 + $0x8] sm:$0xff]
        %v255 = vld [vmem:[%s243 + $0x10] sm:$0xff]
        %v256 = vld [vmem:[%s243 + $0x18] sm:$0xff]
        %v257 = vld [vmem:[%s243 + $0x20] sm:$0xff]
        %v258 = vld [vmem:[%s243 + $0x28] sm:$0xff]
        %v259 = vld [vmem:[%s1] sm:$0xf]
        %v260 = vld [vmem:[%s1 + $0x4] sm:$0xf]
        %v261 = vld [vmem:[%s1 + $0x8] sm:$0xf]
        %v262 = vld [vmem:[%s1 + $0xc] sm:$0xf]
        %v263 = vld [vmem:[%s1 + $0x10] sm:$0xf]
        %v264 = vld [vmem:[%s1 + $0x14] sm:$0xf]
        %v265 = vld [vmem:[%s1 + $0x18] sm:$0xf]
        %v266 = vld [vmem:[%s1 + $0x1c] sm:$0xf]
        %v267 = vld [vmem:[%s1 + $0x20] sm:$0xf]
        %v268 = vld [vmem:[%s1 + $0x24] sm:$0xf]
        %v269 = vld [vmem:[%s1 + $0x28] sm:$0xf]
        %v270 = vld [vmem:[%s1 + $0x2c] sm:$0xf]
        %v271 = vld [vmem:[%s1 + $0x30] sm:$0xf]
        %v272 = vld [vmem:[%s1 + $0x34] sm:$0xf]
        %v273 = vld [vmem:[%s1 + $0x38] sm:$0xf]
        %v274 = vld [vmem:[%s1 + $0x3c] sm:$0xf]
        %v275 = vld [vmem:[%s1 + $0x40] sm:$0xf]
        %v276 = vld [vmem:[%s1 + $0x44] sm:$0xf]
        %v277 = vld [vmem:[%s1 + $0x48] sm:$0xf]
        %v278 = vld [vmem:[%s1 + $0x4c] sm:$0xf]
        %v279 = vld [vmem:[%s1 + $0x50] sm:$0xf]
        %v280 = vld [vmem:[%s1 + $0x54] sm:$0xf]
        %v281 = vld [vmem:[%s1 + $0x58] sm:$0xf]
        %v282 = vld [vmem:[%s1 + $0x5c] sm:$0xf]
        %v283 = vld [vmem:[%s2] sm:$0x1]
        %v285 = vlaneseq
        %v286 = vshrl.u32 %v285, 7
        %v287 = vsub.s32 0, %v286
        %v288 = vrot.slane %v283, %v287
        %v296 = vunpack.c.l.b16 %v253
        %v297 = vunpack.c.h.b16 %v253
        %v298 = vunpack.c.l.b16 %v254
        %v299 = vunpack.c.h.b16 %v254
        %v300 = vunpack.c.l.b16 %v255
        %v301 = vunpack.c.h.b16 %v255
        %v302 = vunpack.c.l.b16 %v256
        %v303 = vunpack.c.h.b16 %v256
        %v304 = vunpack.c.l.b16 %v257
        %v305 = vunpack.c.h.b16 %v257
        %v306 = vunpack.c.l.b16 %v258
        %v307 = vunpack.c.h.b16 %v258
        %v308 = vpack.c.b16 %v298, %v296
        %v309 = vpack.c.b16 %v299, %v297
        %v310 = vpack.c.b16 %v302, %v300
        %v311 = vpack.c.b16 %v303, %v301
        %v312 = vpack.c.b16 %v306, %v304
        %v313 = vpack.c.b16 %v307, %v305
        %v341 = vunpack.c.l.b16 %v259
        %v342 = vunpack.c.l.b16 %v260
        %v343 = vunpack.c.l.b16 %v261
        %v344 = vunpack.c.l.b16 %v262
        %v345 = vunpack.c.l.b16 %v263
        %v346 = vunpack.c.l.b16 %v264
        %v347 = vunpack.c.l.b16 %v265
        %v348 = vunpack.c.l.b16 %v266
        %v349 = vunpack.c.l.b16 %v267
        %v350 = vunpack.c.l.b16 %v268
        %v351 = vunpack.c.l.b16 %v269
        %v352 = vunpack.c.l.b16 %v270
        %v353 = vunpack.c.l.b16 %v271
        %v354 = vunpack.c.l.b16 %v272
        %v355 = vunpack.c.l.b16 %v273
        %v356 = vunpack.c.l.b16 %v274
        %v357 = vunpack.c.l.b16 %v275
        %v358 = vunpack.c.l.b16 %v276
        %v359 = vunpack.c.l.b16 %v277
        %v360 = vunpack.c.l.b16 %v278
        %v361 = vunpack.c.l.b16 %v279
        %v362 = vunpack.c.l.b16 %v280
        %v363 = vunpack.c.l.b16 %v281
        %v364 = vunpack.c.l.b16 %v282
        %v365 = vpack.c.b16 %v342, %v341
        %v366 = vpack.c.b16 %v344, %v343
        %v367 = vpack.c.b16 %v346, %v345
        %v368 = vpack.c.b16 %v348, %v347
        %v369 = vpack.c.b16 %v350, %v349
        %v370 = vpack.c.b16 %v352, %v351
        %v371 = vpack.c.b16 %v354, %v353
        %v372 = vpack.c.b16 %v356, %v355
        %v373 = vpack.c.b16 %v358, %v357
        %v374 = vpack.c.b16 %v360, %v359
        %v375 = vpack.c.b16 %v362, %v361
        %v376 = vpack.c.b16 %v364, %v363
        %vm389 = vcmask 523264
        %v391 = vsel %vm389, %v309, 0
        %v394 = vsel %vm389, %v311, 0
        %v397 = vsel %vm389, %v313, 0
        %399 = vmatprep.subr.bf16.mxu0 0
        %400 = vmatpush1.bf16.msra.mxu0 %v365
        %401 = vmatprep.subr.bf16.mxu0 0
        %402 = vmatpush1.bf16.msra.mxu0 %v366
        %403 = vmatprep.subr.bf16.mxu0 0
        %404 = vmatpush1.bf16.msra.mxu0 %v367
        %405 = vmatprep.subr.bf16.mxu0 0
        %406 = vmatpush1.bf16.msra.mxu0 %v368
        %407 = vmatprep.subr.bf16.mxu0 0
        %408 = vmatpush1.bf16.msra.mxu0 %v369
        %409 = vmatprep.subr.bf16.mxu0 0
        %410 = vmatpush1.bf16.msra.mxu0 %v370
        %411 = vmatprep.subr.bf16.mxu0 0
        %412 = vmatpush1.bf16.msra.mxu0 %v371
        %413 = vmatprep.subr.bf16.mxu0 0
        %414 = vmatpush1.bf16.msra.mxu0 %v372
        %415 = vmatprep.subr.bf16.mxu0 0
        %416 = vmatpush1.bf16.msra.mxu0 %v373
        %417 = vmatprep.subr.bf16.mxu0 0
        %418 = vmatpush1.bf16.msra.mxu0 %v374
        %419 = vmatprep.subr.bf16.mxu0 0
        %420 = vmatpush1.bf16.msra.mxu0 %v375
        %421 = vmatprep.subr.bf16.mxu0 0
        %422 = vmatpush1.bf16.msra.mxu0 %v376
        %423 = vmatprep.subr.bf16.mxu0 0
        %424 = vmatpush1.bf16.msra.mxu0 0
        %425 = vmatprep.subr.bf16.mxu0 0
        %426 = vmatpush1.bf16.msra.mxu0 0
        %427 = vmatprep.subr.bf16.mxu0 0
        %428 = vmatpush1.bf16.msra.mxu0 0
        %429 = vmatprep.subr.bf16.mxu0 0
        %430 = vmatpush1.bf16.msra.mxu0 0
        %431 = vmatprep.mubr.bf16.mxu0 %v391
        %432 = vmatmul.mubr.bf16.gmra.mrb[0].mxu0 %v308
        %v433 = vpop.f32.mrb[0].mxu0
        %v434 = vadd.f32 %v288, %v433
        %v435 = vpop.f32.mrb[0].mxu0
        %v436 = vpop.f32.mrb[0].mxu0
        %v437 = vadd.f32 %v288, %v436
        %v438 = vpop.f32.mrb[0].mxu0
        %439 = vmatprep.mubr.bf16.mxu0 %v394
        %440 = vmatmul.mubr.bf16.gmra.mrb[0].mxu0 %v310
        %v441 = vpop.f32.mrb[0].mxu0
        %v442 = vadd.f32 %v288, %v441
        %v443 = vpop.f32.mrb[0].mxu0
        %v444 = vpop.f32.mrb[0].mxu0
        %v445 = vadd.f32 %v288, %v444
        %v446 = vpop.f32.mrb[0].mxu0
        %447 = vmatprep.mubr.bf16.mxu0 %v397
        %448 = vmatmul.mubr.bf16.gmra.mrb[0].mxu0 %v312
        %v449 = vpop.f32.mrb[0].mxu0
        %v450 = vadd.f32 %v288, %v449
        %v451 = vpop.f32.mrb[0].mxu0
        %v452 = vpop.f32.mrb[0].mxu0
        %v453 = vadd.f32 %v288, %v452
        %v454 = vpop.f32.mrb[0].mxu0
        %455 = vdwg.mxu0
        %v456 = vld [vmem:[%s249] sm:$0xff]
        %v457 = vld [vmem:[%s249 + $0x8] sm:$0xff]
        %v458 = vld [vmem:[%s249 + $0x10] sm:$0xff]
        %v459 = vld [vmem:[%s249 + $0x18] sm:$0xff]
        %v460 = vld [vmem:[%s249 + $0x20] sm:$0xff]
        %v461 = vld [vmem:[%s249 + $0x28] sm:$0xff]
        %v462 = vadd.f32 %v434, %v456
        %v463 = vadd.f32 %v437, %v457
        %v464 = vadd.f32 %v442, %v458
        %v465 = vadd.f32 %v445, %v459
        %v466 = vadd.f32 %v450, %v460
        %v467 = vadd.f32 %v453, %v461
        %468 = vst.msk [vmem:[%s233] sm:$0xff] %vm389, %v462
        %469 = vst.msk [vmem:[%s233 + $0x8] sm:$0xff] %vm389, %v463
        %470 = vst.msk [vmem:[%s233 + $0x10] sm:$0xff] %vm389, %v464
        %471 = vst.msk [vmem:[%s233 + $0x18] sm:$0xff] %vm389, %v465
        %472 = vst.msk [vmem:[%s233 + $0x20] sm:$0xff] %vm389, %v466
        %473 = vst.msk [vmem:[%s233 + $0x28] sm:$0xff] %vm389, %v467
        %s474 = sand.u32 %s136, 1
        %s475 = scalar_lea.sflag [#allocation3], %s474
        %s476 = sand.u32 %s136, 1
        %s477 = smul.addr %s476, 48
        %s478 = scalar_lea.vmem [#allocation2], %s477
        // Predicated region
        $region37: #{tpu_custom_call.1} parent=35 // pred_check
          %p479 = pneg %p146
        $region38: #{tpu_custom_call.1} parent=35 // pred_check_branch
          %481 = sbr.rel (%p479) target = $region40
        $region39: #{tpu_custom_call.1} parent=35 // pred_region
          %s482 = smul.u32 6, %s23
          %s484 = ssub.s32 768, 768
          %485 = vsyncadd %s475, %s484
          %s486 = smul.addr %s22, 6
          %s487 = sadd.s32 %s482, %s486
          %s488 = smul.addr %s487, 128
          %s489 = scalar_lea.hbm %s4, %s488
          %s490 = sshll.u32 %s478, 4
          %s491 = int_to_ptr.vmem [resolvable:$true] %s490
          %496 = dma.vmem_to_hbm [thread:$0]  %s491, 768, %s489, %s475, 128, 128, 8
        $region40: #{tpu_custom_call.1} parent=35 // pred_fallthru
          _
      $region36: #{tpu_custom_call.1} parent=5 // pred_fallthru
        _
      %p497 = scmp.le.s32.totalorder 2, %s13
      // Predicated region
      $region41: #{tpu_custom_call.1} parent=5 // pred_check
        %p498 = pneg %p497
      $region42: #{tpu_custom_call.1} parent=5 // pred_check_branch
        %500 = sbr.rel (%p498) target = $region44
      $region43: #{tpu_custom_call.1} parent=5 // pred_region
        %s501 = ssub.s32 %s13, 2
        // Predicated region
        $region45: #{tpu_custom_call.1} parent=43 // pred_check
          %p502 = pneg %p152
        $region46: #{tpu_custom_call.1} parent=43 // pred_check_branch
          %504 = sbr.rel (%p502) target = $region48
        $region47: #{tpu_custom_call.1} parent=43 // pred_region
          %s505 = sand.u32 %s137, 1
          %s506 = scalar_lea.sflag [#allocation3], %s505
          %s507 = sand.u32 %s137, 1
          %s508 = smul.addr %s507, 48
          %s509 = scalar_lea.vmem [#allocation2], %s508
          %510 = dma.done %s506, 768
        $region48: #{tpu_custom_call.1} parent=43 // pred_fallthru
          _
      $region44: #{tpu_custom_call.1} parent=5 // pred_fallthru
        _
    $region6: #{tpu_custom_call.1} parent=1 // loop_footer
      %s17 = sadd.s32 1, %s13
    $region7: #{tpu_custom_call.1} parent=1 // loop_footer_branch
      %12 = sbr.rel target = $region3
    $region8: #{tpu_custom_call.1} parent=1 // loop_exit
      _
    %511 = vsyncpa [#allocation3], 1
    %s512 = scalar_lea.sflag [#allocation3], 1
    %513 = vsyncpa %s512, 1

</llo_original>
